<compile_context>
chip_gen: v7x
topology: tpu7x:2x2x1
jax: 0.10.0
libtpu: 0.0.40
codegen_flags: <defaults>
</compile_context>

<pallas_src>
import functools
import math

import jax
import jax.numpy as jnp
from jax import lax
from jax.experimental import pallas as pl
from jax.experimental.pallas import tpu as pltpu

# OPU "hardware" constants (from the reference OPU class)
INPUT_VECTOR_LEN = 64
BITS = 4
# TODO(synk): OPU.tia_noise_{mean,sigma} and out_bits are never used in the
# PyTorch forward(), so they are not modeled here.


def _round_up(x, m):
    return ((x + m - 1) // m) * m


def _pick_sub_m(n_lanes, budget_bytes=32 * 1024):
    """Rows per vreg-resident accumulator sub-strip (power of two in [8, 128])."""
    sub = 128
    while sub > 8 and sub * n_lanes * 4 > budget_bytes:
        sub //= 2
    return sub


def _pick_tm(m, sub_m, tm_max=512, min_steps=4):
    """M tile: multiple of sub_m, <= tm_max, aiming for >= min_steps grid steps
    so each v7x TensorCore gets >= 2 steps and the A-tile DMA can be hidden."""
    target = max(sub_m, 64, -(-m // min_steps))          # ceil(m / min_steps)
    return min(_round_up(target, sub_m), _round_up(tm_max, sub_m))


def _vmem_limit_bytes(need):
    """Per-generation VMEM budget with headroom for matmul temps / spills."""
    cap = 64 * 1024 * 1024
    try:
        cap = int(getattr(pltpu.get_tpu_info(), "vmem_capacity_bytes", cap))
    except Exception:
        pass                                             # interpret mode / old runtime
    hard = int(cap * 0.82)                               # ~52 MiB v7x, ~104 MiB v5e/v6e
    soft = max(need + need // 2, 32 * 1024 * 1024)
    return int(min(soft, hard))


# ----------------------------- Pallas kernel ------------------------------ #
def _onn_dot_kernel(a_ref, w_ref, o_ref, *, groups, kg, pack, o_sub, n_chunks,
                    sub_m):
    # a_ref: (TM, K_pad) or (TM, groups, kg)   activations (im2col rows)
    # w_ref: (groups, kg, pack*o_sub)          block-diag weight groups, VMEM-resident
    # o_ref: (TM, o_sub)                       f32 per-row chunk-count output
    n_lanes = pack * o_sub
    tm = o_ref.shape[0]
    # Fully-padded chunk slots (last group only) give s == 0 -> (0 >= 0) = +1
    # per output column; corrected once per sub-strip with a scalar subtraction.
    pad_chunks = groups * pack - n_chunks

    for r0 in range(0, tm, sub_m):                       # static sub-strip loop
        acc0 = jnp.zeros((sub_m, n_lanes), jnp.float32)

        if a_ref.ndim == 3:
            # Deep-K path: bounded live ranges via fori_loop over groups.
            def body(g, acc):
                a_blk = a_ref[pl.ds(r0, sub_m), g, :]
                s = jnp.dot(a_blk, w_ref[g], preferred_element_type=jnp.float32)
                return acc + (s >= 0.0).astype(jnp.float32)
            acc = lax.fori_loop(0, groups, body, acc0, unroll=min(4, groups))
        else:
            # Small `groups`: static unroll (all slices static, 128/64-aligned).
            acc = acc0
            for g in range(groups):
                a_blk = a_ref[r0:r0 + sub_m, g * kg:(g + 1) * kg]
                s = jnp.dot(a_blk, w_ref[g], preferred_element_type=jnp.float32)
                # Per-64-chunk optical threshold. The original clamp(-128,127)
                # cannot change the sign of s, so it is dropped (bit-identical).
                acc = acc + (s >= 0.0).astype(jnp.float32)

        # Fold the `pack` per-chunk sub-blocks onto the o_sub real columns
        # (once per sub-strip), correct for padded chunk slots, single store.
        folded = acc[:, 0:o_sub]
        for p in range(1, pack):
            folded = folded + acc[:, p * o_sub:(p + 1) * o_sub]
        if pad_chunks:
            folded = folded - jnp.float32(pad_chunks)
        o_ref[r0:r0 + sub_m, :] = folded


def _onn_chunked_matmul(a, w_bd, *, n_chunks, pack, o_sub, kg, tm, sub_m):
    """sum_r threshold(A_chunk[r] @ W_chunk[r]) on-TPU via Pallas."""
    groups = w_bd.shape[0]
    m_pad = a.shape[0]
    n_lanes = pack * o_sub
    grid = (m_pad // tm,)

    kernel = functools.partial(_onn_dot_kernel, groups=groups, kg=kg, pack=pack,
                               o_sub=o_sub, n_chunks=n_chunks, sub_m=sub_m)

    if a.ndim == 3:
        a_spec = pl.BlockSpec((tm, groups, kg), lambda i: (i, 0, 0))
        a_bytes = tm * groups * kg * a.dtype.itemsize
    else:
        a_spec = pl.BlockSpec((tm, a.shape[1]), lambda i: (i, 0))
        a_bytes = tm * a.shape[1] * a.dtype.itemsize

    w_bytes = groups * kg * n_lanes * w_bd.dtype.itemsize
    o_bytes = tm * o_sub * 4
    # Double-buffered A / out, weights counted twice to stay safe if Mosaic
    # double-buffers the constant-index block, plus vreg/VMEM temporaries.
    # TODO(synk): stream weight groups (second 'arbitrary' grid axis) when the
    # resident W exceeds ~16-20 MiB on v7x instead of relying on the clamp.
    need = 2 * a_bytes + 2 * w_bytes + 2 * o_bytes + 4 * sub_m * n_lanes * 4
    vmem_limit = _vmem_limit_bytes(need)

    return pl.pallas_call(
        kernel,
        out_shape=jax.ShapeDtypeStruct((m_pad, o_sub), jnp.float32),
        grid_spec=pltpu.PrefetchScalarGridSpec(
            num_scalar_prefetch=0,
            grid=grid,
            in_specs=[
                # One big M tile of the full-K activations per grid step.
                a_spec,
                # Full-array block with a constant index map -> weights stay
                # resident in VMEM, reused by every M tile.
                pl.BlockSpec((groups, kg, n_lanes), lambda i: (0, 0, 0)),
            ],
            out_specs=pl.BlockSpec((tm, o_sub), lambda i: (i, 0)),
        ),
        compiler_params=pltpu.CompilerParams(
            dimension_semantics=("parallel",),
            vmem_limit_bytes=vmem_limit),
    )(a, w_bd)


# ------------------------------ JAX glue ---------------------------------- #
def _im2col_rows(x, k, padding, stride):
    """unfold-equivalent, returning rows (B*Ho*Wo, C*k*k) with c-major K ordering."""
    b, c, h, w = x.shape
    xp = jnp.pad(x, ((0, 0), (0, 0), (padding, padding), (padding, padding)))
    h_out = (h + 2 * padding - k) // stride + 1
    w_out = (w + 2 * padding - k) // stride + 1
    cols = []
    for kh in range(k):
        for kw in range(k):
            cols.append(xp[:, :,
                           kh:kh + stride * (h_out - 1) + 1:stride,
                           kw:kw + stride * (w_out - 1) + 1:stride])
    p = jnp.stack(cols, axis=2)                  # (B, C, k*k, Ho, Wo)
    p = p.transpose(0, 3, 4, 1, 2)               # (B, Ho, Wo, C, k*k)
    a = p.reshape(b * h_out * w_out, c * k * k)  # K index = c*k*k + kh*k + kw
    return a, h_out, w_out


def onn_conv2d_forward(x, weight, *, stride=1, bits=BITS, vlen=INPUT_VECTOR_LEN,
                       tm=None, compute_dtype=jnp.bfloat16):
    b, c_in, h_in, w_in = x.shape
    o_ch, c_w, kh, kw = weight.shape
    assert kh == kw and c_w == c_in
    k = kw
    padding = (k - stride) // 2                              # 'SAME' padding

    # --- weight quantization (parameter prep, plain JAX) ---
    w_scale = (2 ** bits - 1) / (weight.max() - weight.min() + 1e-9)
    wq = jnp.clip(jnp.round(weight * w_scale),
                  -(2 ** (bits - 1) - 1), 2 ** (bits - 1) - 1)
    weight_kxo = wq.reshape(o_ch, -1).T                      # (K, O)

    # --- im2col rows; chunking to the OPU vector length ---
    # TODO(synk): fuse patch extraction into the kernel (index_map over (B,Ho)
    # row blocks) to avoid materializing the im2col matrix in HBM first.
    a, h_out, w_out = _im2col_rows(x, k, padding, stride)    # (M, K)
    m, K = a.shape
    repeats = -(-K // vlen)                                  # number of 64-chunks

    # Lane filling for small o_ch: pack `pack` chunks per block-diagonal group so
    # the matmul-N lanes carry real per-chunk outputs (folded in-kernel).
    o_sub = _round_up(o_ch, 8)
    fill = max(1, 128 // o_sub)
    fill = 1 << (fill.bit_length() - 1)                      # power of two
    pack = max(1, min(fill, repeats))
    groups = -(-repeats // pack)
    kg = pack * vlen
    k_pad = groups * kg
    n_lanes = pack * o_sub

    sub_m = _pick_sub_m(n_lanes)
    tm = _pick_tm(m, sub_m) if tm is None else _round_up(tm, sub_m)
    m_pad = _round_up(m, tm)

    # NOTE: quantized weights are exact in bf16; with float activations, bf16
    # rounding can flip a partial sum that is extremely close to 0 across the
    # threshold -- pass compute_dtype=jnp.float32 if bit-exactness is needed.
    a = a.astype(compute_dtype)                              # cast BEFORE padding
    a = jnp.pad(a, ((0, m_pad - m), (0, k_pad - K)))

    # Block-diagonal weight groups: group g is diag(W_chunk[g*pack], ..., W_chunk[g*pack+pack-1]).
    w_p = jnp.pad(weight_kxo, ((0, k_pad - K), (0, o_sub - o_ch)))
    w_chunks = w_p.reshape(groups, pack, vlen, o_sub)
    eye = jnp.eye(pack, dtype=w_p.dtype)
    w_bd = jnp.einsum('gpko,pq->gpkqo', w_chunks, eye)
    w_bd = w_bd.reshape(groups, kg, n_lanes).astype(compute_dtype)

    # Deep-K layers: 3-D A layout + in-kernel fori_loop (bounded live ranges).
    if groups > 16:
        a = a.reshape(m_pad, groups, kg)

    # --- hot path on TPU ---
    out = _onn_chunked_matmul(a, w_bd, n_chunks=repeats, pack=pack, o_sub=o_sub,
                              kg=kg, tm=tm, sub_m=sub_m)
    out = out[:m, :o_ch]                                     # drop M and O padding
    L = h_out * w_out
    out = out.reshape(b, L, o_ch).transpose(0, 2, 1)         # (B, O, L)
    return out.reshape(b, o_ch, h_out, w_out)                # fold (1,1) == reshape


def _reference_forward(x, weight, *, stride=1, bits=BITS, vlen=INPUT_VECTOR_LEN):
    """Pure-JAX f32 reference of the original module's math (for correctness)."""
    b, c_in, h, w = x.shape
    o_ch = weight.shape[0]
    k = weight.shape[-1]
    padding = (k - stride) // 2
    w_scale = (2 ** bits - 1) / (weight.max() - weight.min() + 1e-9)
    wq = jnp.clip(jnp.round(weight * w_scale),
                  -(2 ** (bits - 1) - 1), 2 ** (bits - 1) - 1)
    w_kxo = wq.reshape(o_ch, -1).T
    a, h_out, w_out = _im2col_rows(x, k, padding, stride)
    K = a.shape[1]
    repeats = -(-K // vlen)
    k_pad = repeats * vlen
    a = jnp.pad(a, ((0, 0), (0, k_pad - K)))
    w_p = jnp.pad(w_kxo, ((0, k_pad - K), (0, 0)))
    acc = jnp.zeros((a.shape[0], o_ch), jnp.float32)
    for r in range(repeats):
        s = a[:, r * vlen:(r + 1) * vlen] @ w_p[r * vlen:(r + 1) * vlen]
        s = jnp.clip(s, -128.0, 127.0)
        acc = acc + jnp.where(s < 0.0, 0.0, 1.0)
    L = h_out * w_out
    return acc.reshape(b, L, o_ch).transpose(0, 2, 1).reshape(b, o_ch, h_out, w_out)


if __name__ == "__main__":
    base_key = jax.random.PRNGKey(0)

    def run_case(case_idx, B, C_IN, C_OUT, H, W, KSZ):
        key = jax.random.fold_in(base_key, case_idx)
        kx, kwt = jax.random.split(key)
        # Integer-valued activations keep the bf16 kernel bit-exact vs the f32
        # reference (and are realistic for a quantized ONN front-end).
        x = jnp.clip(jnp.round(jax.random.normal(kx, (B, C_IN, H, W)) * 4.0),
                     -32, 32).astype(jnp.float32)
        # kaiming_uniform_(a=sqrt(5)) equivalent: U(-1/sqrt(fan_in), 1/sqrt(fan_in))
        fan_in = C_IN * KSZ * KSZ
        bound = 1.0 / math.sqrt(fan_in)
        weight = jax.random.uniform(kwt, (C_OUT, C_IN, KSZ, KSZ),
                                    dtype=jnp.float32, minval=-bound, maxval=bound)
        out = jax.block_until_ready(onn_conv2d_forward(x, weight, stride=1))
        ref = _reference_forward(x, weight, stride=1)
        assert out.shape == (B, C_OUT, H, W), out.shape
        assert jnp.allclose(out, ref, atol=1e-5), "mismatch vs pure-JAX reference"

    # K = 72 -> 2 chunks, o_ch=8 -> pack=2 (lane filling), one weight group.
    run_case(0, 2, 8, 8, 16, 16, 3)
    # K = 36 -> 1 chunk, o_ch=4 -> pack=1, narrow (8-lane) output store.
    run_case(1, 2, 4, 4, 16, 16, 3)

    print("KERNEL_OK")
</pallas_src>

<mosaic_0001>
module attributes {stable_mosaic.version = 11 : i64} {
  func.func @_onn_dot_kernel(%arg0: i32, %arg1: memref<128x128xbf16, #tpu.memory_space<vmem>>, %arg2: memref<1x128x16xbf16, #tpu.memory_space<vmem>>, %arg3: memref<128x8xf32, #tpu.memory_space<vmem>>) attributes {dimension_semantics = [#tpu.dimension_semantics<parallel>], iteration_bounds = array<i64: 4>, scalar_prefetch = 0 : i64, scratch_operands = 0 : i64, tpu.core_type = #tpu.core_type<tc>, window_params = [{transform_indices = @transform_0, window_bounds = array<i64: 128, 128>}, {pipeline_mode = #tpu.pipeline_mode<synchronous>, transform_indices = @transform_1, window_bounds = array<i64: 1, 128, 16>}, {transform_indices = @transform_2, window_bounds = array<i64: 128, 8>}]} {
    %cst = arith.constant 0.000000e+00 : f32
    %0 = vector.broadcast %cst : f32 to vector<128x16xf32>
    %c0 = arith.constant 0 : index
    %c0_0 = arith.constant 0 : index
    %1 = vector.load %arg1[%c0, %c0_0] : memref<128x128xbf16, #tpu.memory_space<vmem>>, vector<128x128xbf16>
    %c0_1 = arith.constant 0 : index
    %c0_2 = arith.constant 0 : index
    %c0_3 = arith.constant 0 : index
    %2 = vector.load %arg2[%c0_1, %c0_2, %c0_3] : memref<1x128x16xbf16, #tpu.memory_space<vmem>>, vector<1x128x16xbf16>
    %3 = vector.shape_cast %2 : vector<1x128x16xbf16> to vector<128x16xbf16>
    %cst_4 = arith.constant dense<0.000000e+00> : vector<128x16xf32>
    %4 = tpu.matmul %1, %3, %cst_4 {dimension_numbers = #tpu.dot_dimension_numbers<[1], [0], [0], [1], [0, 0, 1, 1], [], []>} : vector<128x128xbf16>, vector<128x16xbf16>, vector<128x16xf32> -> vector<128x16xf32>
    %cst_5 = arith.constant 0.000000e+00 : f32
    %5 = vector.broadcast %cst_5 : f32 to vector<128x16xf32>
    %6 = arith.cmpf oge, %4, %5 : vector<128x16xf32>
    %7 = arith.extui %6 : vector<128x16xi1> to vector<128x16xi32>
    %8 = arith.sitofp %7 : vector<128x16xi32> to vector<128x16xf32>
    %9 = arith.addf %0, %8 : vector<128x16xf32>
    %10 = vector.extract_strided_slice %9 {offsets = [0, 0], sizes = [128, 8], strides = [1, 1]} : vector<128x16xf32> to vector<128x8xf32>
    %11 = vector.extract_strided_slice %9 {offsets = [0, 8], sizes = [128, 8], strides = [1, 1]} : vector<128x16xf32> to vector<128x8xf32>
    %12 = arith.addf %10, %11 : vector<128x8xf32>
    %c0_6 = arith.constant 0 : index
    %c0_7 = arith.constant 0 : index
    %13 = vector.load %arg3[%c0_6, %c0_7] : memref<128x8xf32, #tpu.memory_space<vmem>>, vector<128x8xf32>
    tpu.vector_store %arg3[%c0_6, %c0_7], %12 {strides = array<i32>} : memref<128x8xf32, #tpu.memory_space<vmem>>, vector<128x8xf32>,
    return
  }
  func.func @transform_0(%arg0: i32) -> (i32, i32) {
    %c0_i32 = arith.constant 0 : i32
    %c0_i32_0 = arith.constant 0 : i32
    return %arg0, %c0_i32 : i32, i32
  }
  func.func @transform_1(%arg0: i32) -> (i32, i32, i32) {
    %c0_i32 = arith.constant 0 : i32
    %c0_i32_0 = arith.constant 0 : i32
    %c0_i32_1 = arith.constant 0 : i32
    %c0_i32_2 = arith.constant 0 : i32
    return %c0_i32, %c0_i32_0, %c0_i32_1 : i32, i32, i32
  }
  func.func @transform_2(%arg0: i32) -> (i32, i32) {
    %c0_i32 = arith.constant 0 : i32
    %c0_i32_0 = arith.constant 0 : i32
    return %arg0, %c0_i32 : i32, i32
  }
}

</mosaic_0001>

<llo_original>
// kernel: tpu_custom_call.1
$region0: #{tpu_custom_call.1}
  #allocation0 [shape = 'u32[]', space=smem, size = 0x4, offset = 0x4, fixed_abs, tag = 'smem constant byte address 0x4 - core index']
  #allocation1 [shape = 'u32[144,128]{1,0:T(1,128)}', space=vmem, size = 0x12000, scoped, tag = 'internal scratch']
  %s0 = inlined_call_operand.hbm [shape: bf16[512,128], index: 0, kind: input, shape index: {}]
  %s1 = inlined_call_operand.vmem [shape: bf16[1,128,16], index: 1, kind: input, shape index: {}]
  %s2 = inlined_call_operand.vmem [shape: f32[512,8], index: 2, kind: output, shape index: {}]
  %s3 = sld [smem:[#allocation0]]
  $region45: #{tpu_custom_call.1} parent=0
    _
  %s5 = ssub.s32 1, %s3
  %s6 = scalar_select 0, %s5, %s3
  $region1: #{tpu_custom_call.1} parent=0
    #allocation2 [shape = 'u8[65536]{0}', space=vmem, size = 0x10000, scoped, tag = 'input window, operand 0']
    #allocation3 [shape = 's32[2]{0}', space=sflag, size = 0x8, scoped, tag = 'scoped memory for tpu_custom_call.1']
    %7 = vsyncpa [#allocation3], 0
    %s8 = scalar_lea.sflag [#allocation3], 1
    %9 = vsyncpa %s8, 0
    loop: start=0, step=1, limit=6
    $region2: #{tpu_custom_call.1} parent=1 // loop_pre_header
      _
    $region3: #{tpu_custom_call.1} parent=1 // loop_header
      %s11 = sphi 0, %s15
      %p12 = scmp.ge.s32.totalorder %s11, 6
      %s21 = sphi 0, %s23
      %s24 = sphi 0, %s21
      %s25 = sphi 0, %s24
      %s41 = sphi 0, %s25
      %s45 = sphi 0, %s45
      %s47 = sphi 0, %s45
      %s48 = sphi 0, %s47
      %s62 = sphi 0, %s48
      %s68 = sphi 0, %s70
      %s71 = sphi 0, %s68
      %s72 = sphi 0, %s71
      %s88 = sphi 0, %s72
    $region4: #{tpu_custom_call.1} parent=1 // loop_header_branch
      %14 = sbr.rel (%p12) target = $region8
    $region5: #{tpu_custom_call.1} parent=1 // loop_body
      %s16 = ssub.s32 %s11, 1
      %s17 = ssub.s32 %s11, 2
      %s18 = sadd.s32 %s11, 1
      %s19 = ssub.s32 %s11, %s18
      %p20 = scmp.eq.s32.totalorder %s19, 0
      %s22 = sadd.s32 %s21, 1
      %s23 = scalar_select %p20, %s21, %s22
      %p26 = pneg %p20
      %p27 = scmp.eq.s32.totalorder %s11, 3
      %p28 = por %p26, %p27
      %p29 = scmp.ne.s32.totalorder %s21, %s24
      %p30 = scmp.eq.s32.totalorder %s11, 0
      %p31 = por %p29, %p30
      %p32 = scmp.ne.s32.totalorder %s21, %s24
      %p33 = scmp.eq.s32.totalorder %s16, 3
      %p34 = por %p32, %p33
      %p35 = scmp.ne.s32.totalorder %s24, %s25
      %p36 = scmp.eq.s32.totalorder %s16, 0
      %p37 = por %p35, %p36
      %p38 = scmp.ne.s32.totalorder %s24, %s25
      %p39 = scmp.eq.s32.totalorder %s17, 3
      %p40 = por %p38, %p39
      %p42 = scmp.ne.s32.totalorder %s25, %s41
      %p43 = scmp.eq.s32.totalorder %s17, 0
      %p44 = por %p42, %p43
      %s46 = sadd.s32 %s45, 1
      %p49 = scmp.eq.s32.totalorder %s11, 3
      %p50 = scmp.ne.s32.totalorder %s45, %s47
      %p51 = scmp.eq.s32.totalorder %s11, 0
      %p52 = por %p50, %p51
      %p53 = scmp.ne.s32.totalorder %s45, %s47
      %p54 = scmp.eq.s32.totalorder %s16, 3
      %p55 = por %p53, %p54
      %p56 = scmp.ne.s32.totalorder %s47, %s48
      %p57 = scmp.eq.s32.totalorder %s16, 0
      %p58 = por %p56, %p57
      %p59 = scmp.ne.s32.totalorder %s47, %s48
      %p60 = scmp.eq.s32.totalorder %s17, 3
      %p61 = por %p59, %p60
      %p63 = scmp.ne.s32.totalorder %s48, %s62
      %p64 = scmp.eq.s32.totalorder %s17, 0
      %p65 = por %p63, %p64
      %s66 = ssub.s32 %s11, %s18
      %p67 = scmp.eq.s32.totalorder %s66, 0
      %s69 = sadd.s32 %s68, 1
      %s70 = scalar_select %p67, %s68, %s69
      %p73 = pneg %p67
      %p74 = scmp.eq.s32.totalorder %s11, 3
      %p75 = por %p73, %p74
      %p76 = scmp.ne.s32.totalorder %s68, %s71
      %p77 = scmp.eq.s32.totalorder %s11, 0
      %p78 = por %p76, %p77
      %p79 = scmp.ne.s32.totalorder %s68, %s71
      %p80 = scmp.eq.s32.totalorder %s16, 3
      %p81 = por %p79, %p80
      %p82 = scmp.ne.s32.totalorder %s71, %s72
      %p83 = scmp.eq.s32.totalorder %s16, 0
      %p84 = por %p82, %p83
      %p85 = scmp.ne.s32.totalorder %s71, %s72
      %p86 = scmp.eq.s32.totalorder %s17, 3
      %p87 = por %p85, %p86
      %p89 = scmp.ne.s32.totalorder %s72, %s88
      %p90 = scmp.eq.s32.totalorder %s17, 0
      %p91 = por %p89, %p90
      %p92 = scmp.le.s32.totalorder 1, %s11
      %p93 = scmp.lt.s32.totalorder %s11, 5
      %p94 = pnand %p92, %p93
      %p95 = pneg %p94
      // Predicated region
      $region9: #{tpu_custom_call.1} parent=5 // pred_check
        _
      $region10: #{tpu_custom_call.1} parent=5 // pred_check_branch
        %97 = sbr.rel (%p94) target = $region12
      $region11: #{tpu_custom_call.1} parent=5 // pred_region
        %s98 = ssub.s32 %s11, 1
        // Predicated region
        $region13: #{tpu_custom_call.1} parent=11 // pred_check
          %p99 = pneg %p58
        $region14: #{tpu_custom_call.1} parent=11 // pred_check_branch
          %101 = sbr.rel (%p99) target = $region16
        $region15: #{tpu_custom_call.1} parent=11 // pred_region
          _
        $region16: #{tpu_custom_call.1} parent=11 // pred_fallthru
          _
      $region12: #{tpu_custom_call.1} parent=5 // pred_fallthru
        _
      %p102 = scmp.lt.s32.totalorder %s11, 4
      // Predicated region
      $region17: #{tpu_custom_call.1} parent=5 // pred_check
        %p103 = pneg %p102
      $region18: #{tpu_custom_call.1} parent=5 // pred_check_branch
        %105 = sbr.rel (%p103) target = $region20
      $region19: #{tpu_custom_call.1} parent=5 // pred_region
        // Predicated region
        $region21: #{tpu_custom_call.1} parent=19 // pred_check
          %p106 = pneg %p31
        $region22: #{tpu_custom_call.1} parent=19 // pred_check_branch
          %108 = sbr.rel (%p106) target = $region24
        $region23: #{tpu_custom_call.1} parent=19 // pred_region
          %s109 = sand.u32 %s21, 1
          %s110 = scalar_lea.sflag [#allocation3], %s109
          %s111 = sand.u32 %s21, 1
          %s112 = smul.addr %s111, 64
          %s113 = scalar_lea.vmem [#allocation2], %s112
          %s114 = smul.u32 16, %s11
          %s116 = ssub.s32 1024, 1024
          %117 = vsyncadd %s110, %s116
          %s118 = smul.addr %s114, 64
          %s119 = scalar_lea.hbm %s0, %s118
          %s120 = sshll.u32 %s113, 4
          %s121 = int_to_ptr.vmem [resolvable:$true] %s120
          %126 = dma.hbm_to_vmem [thread:$0]  %s119, 1024, %s121, %s110, 64, 64, 4
        $region24: #{tpu_custom_call.1} parent=19 // pred_fallthru
          _
      $region20: #{tpu_custom_call.1} parent=5 // pred_fallthru
        _
      %p127 = scmp.le.s32.totalorder 1, %s11
      %p128 = scmp.lt.s32.totalorder %s11, 5
      %p129 = pnand %p127, %p128
      %p130 = pneg %p129
      // Predicated region
      $region25: #{tpu_custom_call.1} parent=5 // pred_check
        _
      $region26: #{tpu_custom_call.1} parent=5 // pred_check_branch
        %132 = sbr.rel (%p129) target = $region28
      $region27: #{tpu_custom_call.1} parent=5 // pred_region
        %s133 = ssub.s32 %s11, 1
        %s134 = sand.u32 %s24, 1
        %s135 = scalar_lea.sflag [#allocation3], %s134
        %s136 = sand.u32 %s24, 1
        %s137 = smul.addr %s136, 64
        %s138 = scalar_lea.vmem [#allocation2], %s137
        // Predicated region
        $region29: #{tpu_custom_call.1} parent=27 // pred_check
          %p139 = pneg %p37
        $region30: #{tpu_custom_call.1} parent=27 // pred_check_branch
          %141 = sbr.rel (%p139) target = $region32
        $region31: #{tpu_custom_call.1} parent=27 // pred_region
          %142 = dma.done %s135, 1024
        $region32: #{tpu_custom_call.1} parent=27 // pred_fallthru
          _
        %s143 = sand.u32 %s24, 1
        %s144 = scalar_lea.sflag [#allocation3], %s143
        %s145 = sand.u32 %s24, 1
        %s146 = smul.addr %s145, 64
        %s147 = scalar_lea.vmem [#allocation2], %s146
        %p148 = pneg %p37
        %p149 = pneg %p34
        %p150 = pneg %p58
        %p151 = pneg %p55
        %p152 = pneg %p84
        %p153 = pneg %p81
        %s154 = smul.u32 16, %s16
        %p155 = scmp.lt.s32.totalorder %s154, 63
        %s156 = scalar_select %p155, %s154, 63
        %s157 = smul.addr %s156, 8
        %s158 = scalar_lea.vmem %s2, %s157
        %s159 = smul.u32 16, %s16
        %s160 = smul.u32 16, %s16
        %p161 = scmp.lt.s32.totalorder %s160, 63
        %s162 = scalar_select %p161, %s160, 63
        %s163 = smul.addr %s162, 8
        %s164 = scalar_lea.vmem %s2, %s163
        %s165 = smul.u32 16, %s16
        %v167 = vld [vmem:[%s138] sm:$0xf]
        %v168 = vld [vmem:[%s138 + $0x4] sm:$0xf]
        %v169 = vld [vmem:[%s138 + $0x8] sm:$0xf]
        %v170 = vld [vmem:[%s138 + $0xc] sm:$0xf]
        %v171 = vld [vmem:[%s138 + $0x10] sm:$0xf]
        %v172 = vld [vmem:[%s138 + $0x14] sm:$0xf]
        %v173 = vld [vmem:[%s138 + $0x18] sm:$0xf]
        %v174 = vld [vmem:[%s138 + $0x1c] sm:$0xf]
        %v175 = vld [vmem:[%s138 + $0x20] sm:$0xf]
        %v176 = vld [vmem:[%s138 + $0x24] sm:$0xf]
        %v177 = vld [vmem:[%s138 + $0x28] sm:$0xf]
        %v178 = vld [vmem:[%s138 + $0x2c] sm:$0xf]
        %v179 = vld [vmem:[%s138 + $0x30] sm:$0xf]
        %v180 = vld [vmem:[%s138 + $0x34] sm:$0xf]
        %v181 = vld [vmem:[%s138 + $0x38] sm:$0xf]
        %v182 = vld [vmem:[%s138 + $0x3c] sm:$0xf]
        %v183 = vld [vmem:[%s1] sm:$0xf]
        %v184 = vld [vmem:[%s1 + $0x4] sm:$0xf]
        %v185 = vld [vmem:[%s1 + $0x8] sm:$0xf]
        %v186 = vld [vmem:[%s1 + $0xc] sm:$0xf]
        %v187 = vld [vmem:[%s1 + $0x10] sm:$0xf]
        %v188 = vld [vmem:[%s1 + $0x14] sm:$0xf]
        %v189 = vld [vmem:[%s1 + $0x18] sm:$0xf]
        %v190 = vld [vmem:[%s1 + $0x1c] sm:$0xf]
        %v191 = vld [vmem:[%s1 + $0x20] sm:$0xf]
        %v192 = vld [vmem:[%s1 + $0x24] sm:$0xf]
        %v193 = vld [vmem:[%s1 + $0x28] sm:$0xf]
        %v194 = vld [vmem:[%s1 + $0x2c] sm:$0xf]
        %v195 = vld [vmem:[%s1 + $0x30] sm:$0xf]
        %v196 = vld [vmem:[%s1 + $0x34] sm:$0xf]
        %v197 = vld [vmem:[%s1 + $0x38] sm:$0xf]
        %v198 = vld [vmem:[%s1 + $0x3c] sm:$0xf]
        %v215 = vunpack.c.l.b16 %v167
        %v216 = vunpack.c.l.b16 %v168
        %v217 = vunpack.c.l.b16 %v169
        %v218 = vunpack.c.l.b16 %v170
        %v219 = vunpack.c.l.b16 %v171
        %v220 = vunpack.c.l.b16 %v172
        %v221 = vunpack.c.l.b16 %v173
        %v222 = vunpack.c.l.b16 %v174
        %v223 = vunpack.c.l.b16 %v175
        %v224 = vunpack.c.l.b16 %v176
        %v225 = vunpack.c.l.b16 %v177
        %v226 = vunpack.c.l.b16 %v178
        %v227 = vunpack.c.l.b16 %v179
        %v228 = vunpack.c.l.b16 %v180
        %v229 = vunpack.c.l.b16 %v181
        %v230 = vunpack.c.l.b16 %v182
        %v231 = vpack.c.b16 %v216, %v215
        %v232 = vpack.c.b16 %v218, %v217
        %v233 = vpack.c.b16 %v220, %v219
        %v234 = vpack.c.b16 %v222, %v221
        %v235 = vpack.c.b16 %v224, %v223
        %v236 = vpack.c.b16 %v226, %v225
        %v237 = vpack.c.b16 %v228, %v227
        %v238 = vpack.c.b16 %v230, %v229
        %v263 = vunpack.c.l.b16 %v183
        %v264 = vunpack.c.l.b16 %v184
        %v265 = vunpack.c.l.b16 %v185
        %v266 = vunpack.c.l.b16 %v186
        %v267 = vunpack.c.l.b16 %v187
        %v268 = vunpack.c.l.b16 %v188
        %v269 = vunpack.c.l.b16 %v189
        %v270 = vunpack.c.l.b16 %v190
        %v271 = vunpack.c.l.b16 %v191
        %v272 = vunpack.c.l.b16 %v192
        %v273 = vunpack.c.l.b16 %v193
        %v274 = vunpack.c.l.b16 %v194
        %v275 = vunpack.c.l.b16 %v195
        %v276 = vunpack.c.l.b16 %v196
        %v277 = vunpack.c.l.b16 %v197
        %v278 = vunpack.c.l.b16 %v198
        %v279 = vpack.c.b16 %v264, %v263
        %v280 = vpack.c.b16 %v266, %v265
        %v281 = vpack.c.b16 %v268, %v267
        %v282 = vpack.c.b16 %v270, %v269
        %v283 = vpack.c.b16 %v272, %v271
        %v284 = vpack.c.b16 %v274, %v273
        %v285 = vpack.c.b16 %v276, %v275
        %v286 = vpack.c.b16 %v278, %v277
        %295 = vmatprep.subr.bf16.mxu0 0
        %296 = vmatpush1.bf16.msra.mxu0 %v279
        %297 = vmatprep.subr.bf16.mxu0 0
        %298 = vmatpush1.bf16.msra.mxu0 %v280
        %299 = vmatprep.subr.bf16.mxu0 0
        %300 = vmatpush1.bf16.msra.mxu0 %v281
        %301 = vmatprep.subr.bf16.mxu0 0
        %302 = vmatpush1.bf16.msra.mxu0 %v282
        %303 = vmatprep.subr.bf16.mxu0 0
        %304 = vmatpush1.bf16.msra.mxu0 %v283
        %305 = vmatprep.subr.bf16.mxu0 0
        %306 = vmatpush1.bf16.msra.mxu0 %v284
        %307 = vmatprep.subr.bf16.mxu0 0
        %308 = vmatpush1.bf16.msra.mxu0 %v285
        %309 = vmatprep.subr.bf16.mxu0 0
        %310 = vmatpush1.bf16.msra.mxu0 %v286
        %311 = vmatprep.subr.bf16.mxu0 0
        %312 = vmatpush1.bf16.msra.mxu0 0
        %313 = vmatprep.subr.bf16.mxu0 0
        %314 = vmatpush1.bf16.msra.mxu0 0
        %315 = vmatprep.subr.bf16.mxu0 0
        %316 = vmatpush1.bf16.msra.mxu0 0
        %317 = vmatprep.subr.bf16.mxu0 0
        %318 = vmatpush1.bf16.msra.mxu0 0
        %319 = vmatprep.subr.bf16.mxu0 0
        %320 = vmatpush1.bf16.msra.mxu0 0
        %321 = vmatprep.subr.bf16.mxu0 0
        %322 = vmatpush1.bf16.msra.mxu0 0
        %323 = vmatprep.subr.bf16.mxu0 0
        %324 = vmatpush1.bf16.msra.mxu0 0
        %325 = vmatprep.subr.bf16.mxu0 0
        %326 = vmatpush1.bf16.msra.mxu0 0
        %327 = vmatprep.mubr.bf16.mxu0 0
        %328 = vmatmul.mubr.bf16.gmra.mrb[0].mxu0 %v231
        %v329 = vpop.f32.mrb[0].mxu0
        %v330 = vadd.f32 0.0, %v329
        %v331 = vpop.f32.mrb[0].mxu0
        %v332 = vpop.f32.mrb[0].mxu0
        %v333 = vadd.f32 0.0, %v332
        %v334 = vpop.f32.mrb[0].mxu0
        %335 = vmatprep.mubr.bf16.mxu0 0
        %336 = vmatmul.mubr.bf16.gmra.mrb[0].mxu0 %v232
        %v337 = vpop.f32.mrb[0].mxu0
        %v338 = vadd.f32 0.0, %v337
        %v339 = vpop.f32.mrb[0].mxu0
        %v340 = vpop.f32.mrb[0].mxu0
        %v341 = vadd.f32 0.0, %v340
        %v342 = vpop.f32.mrb[0].mxu0
        %343 = vmatprep.mubr.bf16.mxu0 0
        %344 = vmatmul.mubr.bf16.gmra.mrb[0].mxu0 %v233
        %v345 = vpop.f32.mrb[0].mxu0
        %v346 = vadd.f32 0.0, %v345
        %v347 = vpop.f32.mrb[0].mxu0
        %v348 = vpop.f32.mrb[0].mxu0
        %v349 = vadd.f32 0.0, %v348
        %v350 = vpop.f32.mrb[0].mxu0
        %351 = vmatprep.mubr.bf16.mxu0 0
        %352 = vmatmul.mubr.bf16.gmra.mrb[0].mxu0 %v234
        %v353 = vpop.f32.mrb[0].mxu0
        %v354 = vadd.f32 0.0, %v353
        %v355 = vpop.f32.mrb[0].mxu0
        %v356 = vpop.f32.mrb[0].mxu0
        %v357 = vadd.f32 0.0, %v356
        %v358 = vpop.f32.mrb[0].mxu0
        %359 = vmatprep.mubr.bf16.mxu0 0
        %360 = vmatmul.mubr.bf16.gmra.mrb[0].mxu0 %v235
        %v361 = vpop.f32.mrb[0].mxu0
        %v362 = vadd.f32 0.0, %v361
        %v363 = vpop.f32.mrb[0].mxu0
        %v364 = vpop.f32.mrb[0].mxu0
        %v365 = vadd.f32 0.0, %v364
        %v366 = vpop.f32.mrb[0].mxu0
        %367 = vmatprep.mubr.bf16.mxu0 0
        %368 = vmatmul.mubr.bf16.gmra.mrb[0].mxu0 %v236
        %v369 = vpop.f32.mrb[0].mxu0
        %v370 = vadd.f32 0.0, %v369
        %v371 = vpop.f32.mrb[0].mxu0
        %v372 = vpop.f32.mrb[0].mxu0
        %v373 = vadd.f32 0.0, %v372
        %v374 = vpop.f32.mrb[0].mxu0
        %375 = vmatprep.mubr.bf16.mxu0 0
        %376 = vmatmul.mubr.bf16.gmra.mrb[0].mxu0 %v237
        %v377 = vpop.f32.mrb[0].mxu0
        %v378 = vadd.f32 0.0, %v377
        %v379 = vpop.f32.mrb[0].mxu0
        %v380 = vpop.f32.mrb[0].mxu0
        %v381 = vadd.f32 0.0, %v380
        %v382 = vpop.f32.mrb[0].mxu0
        %383 = vmatprep.mubr.bf16.mxu0 0
        %384 = vmatmul.mubr.bf16.gmra.mrb[0].mxu0 %v238
        %v385 = vpop.f32.mrb[0].mxu0
        %v386 = vadd.f32 0.0, %v385
        %v387 = vpop.f32.mrb[0].mxu0
        %v388 = vpop.f32.mrb[0].mxu0
        %v389 = vadd.f32 0.0, %v388
        %v390 = vpop.f32.mrb[0].mxu0
        %391 = vdwg.mxu0
        %vm392 = vcmp.ge.f32.partialorder %v330, 0.0
        %vm393 = vcmp.ge.f32.partialorder %v333, 0.0
        %vm394 = vcmp.ge.f32.partialorder %v338, 0.0
        %vm395 = vcmp.ge.f32.partialorder %v341, 0.0
        %vm396 = vcmp.ge.f32.partialorder %v346, 0.0
        %vm397 = vcmp.ge.f32.partialorder %v349, 0.0
        %vm398 = vcmp.ge.f32.partialorder %v354, 0.0
        %vm399 = vcmp.ge.f32.partialorder %v357, 0.0
        %vm400 = vcmp.ge.f32.partialorder %v362, 0.0
        %vm401 = vcmp.ge.f32.partialorder %v365, 0.0
        %vm402 = vcmp.ge.f32.partialorder %v370, 0.0
        %vm403 = vcmp.ge.f32.partialorder %v373, 0.0
        %vm404 = vcmp.ge.f32.partialorder %v378, 0.0
        %vm405 = vcmp.ge.f32.partialorder %v381, 0.0
        %vm406 = vcmp.ge.f32.partialorder %v386, 0.0
        %vm407 = vcmp.ge.f32.partialorder %v389, 0.0
        %v408 = vsel %vm392, 1, 0
        %v409 = vsel %vm393, 1, 0
        %v410 = vsel %vm394, 1, 0
        %v411 = vsel %vm395, 1, 0
        %v412 = vsel %vm396, 1, 0
        %v413 = vsel %vm397, 1, 0
        %v414 = vsel %vm398, 1, 0
        %v415 = vsel %vm399, 1, 0
        %v416 = vsel %vm400, 1, 0
        %v417 = vsel %vm401, 1, 0
        %v418 = vsel %vm402, 1, 0
        %v419 = vsel %vm403, 1, 0
        %v420 = vsel %vm404, 1, 0
        %v421 = vsel %vm405, 1, 0
        %v422 = vsel %vm406, 1, 0
        %v423 = vsel %vm407, 1, 0
        %v424 = vcvt.s32.f32 %v408
        %v425 = vcvt.s32.f32 %v409
        %v426 = vcvt.s32.f32 %v410
        %v427 = vcvt.s32.f32 %v411
        %v428 = vcvt.s32.f32 %v412
        %v429 = vcvt.s32.f32 %v413
        %v430 = vcvt.s32.f32 %v414
        %v431 = vcvt.s32.f32 %v415
        %v432 = vcvt.s32.f32 %v416
        %v433 = vcvt.s32.f32 %v417
        %v434 = vcvt.s32.f32 %v418
        %v435 = vcvt.s32.f32 %v419
        %v436 = vcvt.s32.f32 %v420
        %v437 = vcvt.s32.f32 %v421
        %v438 = vcvt.s32.f32 %v422
        %v439 = vcvt.s32.f32 %v423
        %v440 = vadd.f32 %v424, 0.0
        %v441 = vadd.f32 %v425, 0.0
        %v442 = vadd.f32 %v426, 0.0
        %v443 = vadd.f32 %v427, 0.0
        %v444 = vadd.f32 %v428, 0.0
        %v445 = vadd.f32 %v429, 0.0
        %v446 = vadd.f32 %v430, 0.0
        %v447 = vadd.f32 %v431, 0.0
        %v448 = vadd.f32 %v432, 0.0
        %v449 = vadd.f32 %v433, 0.0
        %v450 = vadd.f32 %v434, 0.0
        %v451 = vadd.f32 %v435, 0.0
        %v452 = vadd.f32 %v436, 0.0
        %v453 = vadd.f32 %v437, 0.0
        %v454 = vadd.f32 %v438, 0.0
        %v455 = vadd.f32 %v439, 0.0
        %472 = vrot.lane.b32.xlu0 %v440, 120
        %v473 = vpop.permute.xlu0 %472
        %474 = vrot.lane.b32.xlu0 %v441, 120
        %v475 = vpop.permute.xlu0 %474
        %476 = vrot.lane.b32.xlu0 %v442, 120
        %v477 = vpop.permute.xlu0 %476
        %478 = vrot.lane.b32.xlu0 %v443, 120
        %v479 = vpop.permute.xlu0 %478
        %480 = vrot.lane.b32.xlu0 %v444, 120
        %v481 = vpop.permute.xlu0 %480
        %482 = vrot.lane.b32.xlu0 %v445, 120
        %v483 = vpop.permute.xlu0 %482
        %484 = vrot.lane.b32.xlu0 %v446, 120
        %v485 = vpop.permute.xlu0 %484
        %486 = vrot.lane.b32.xlu0 %v447, 120
        %v487 = vpop.permute.xlu0 %486
        %488 = vrot.lane.b32.xlu0 %v448, 120
        %v489 = vpop.permute.xlu0 %488
        %490 = vrot.lane.b32.xlu0 %v449, 120
        %v491 = vpop.permute.xlu0 %490
        %492 = vrot.lane.b32.xlu0 %v450, 120
        %v493 = vpop.permute.xlu0 %492
        %494 = vrot.lane.b32.xlu0 %v451, 120
        %v495 = vpop.permute.xlu0 %494
        %496 = vrot.lane.b32.xlu0 %v452, 120
        %v497 = vpop.permute.xlu0 %496
        %498 = vrot.lane.b32.xlu0 %v453, 120
        %v499 = vpop.permute.xlu0 %498
        %500 = vrot.lane.b32.xlu0 %v454, 120
        %v501 = vpop.permute.xlu0 %500
        %502 = vrot.lane.b32.xlu0 %v455, 120
        %v503 = vpop.permute.xlu0 %502
        %v520 = vadd.f32 %v440, %v473
        %v521 = vadd.f32 %v441, %v475
        %v522 = vadd.f32 %v442, %v477
        %v523 = vadd.f32 %v443, %v479
        %v524 = vadd.f32 %v444, %v481
        %v525 = vadd.f32 %v445, %v483
        %v526 = vadd.f32 %v446, %v485
        %v527 = vadd.f32 %v447, %v487
        %v528 = vadd.f32 %v448, %v489
        %v529 = vadd.f32 %v449, %v491
        %v530 = vadd.f32 %v450, %v493
        %v531 = vadd.f32 %v451, %v495
        %v532 = vadd.f32 %v452, %v497
        %v533 = vadd.f32 %v453, %v499
        %v534 = vadd.f32 %v454, %v501
        %v535 = vadd.f32 %v455, %v503
        %vm536 = vcmask 64512
        %537 = vst.msk [vmem:[%s164] sm:$0xff] %vm536, %v520
        %538 = vst.msk [vmem:[%s164 + $0x8] sm:$0xff] %vm536, %v521
        %539 = vst.msk [vmem:[%s164 + $0x10] sm:$0xff] %vm536, %v522
        %540 = vst.msk [vmem:[%s164 + $0x18] sm:$0xff] %vm536, %v523
        %541 = vst.msk [vmem:[%s164 + $0x20] sm:$0xff] %vm536, %v524
        %542 = vst.msk [vmem:[%s164 + $0x28] sm:$0xff] %vm536, %v525
        %543 = vst.msk [vmem:[%s164 + $0x30] sm:$0xff] %vm536, %v526
        %544 = vst.msk [vmem:[%s164 + $0x38] sm:$0xff] %vm536, %v527
        %545 = vst.msk [vmem:[%s164 + $0x40] sm:$0xff] %vm536, %v528
        %546 = vst.msk [vmem:[%s164 + $0x48] sm:$0xff] %vm536, %v529
        %547 = vst.msk [vmem:[%s164 + $0x50] sm:$0xff] %vm536, %v530
        %548 = vst.msk [vmem:[%s164 + $0x58] sm:$0xff] %vm536, %v531
        %549 = vst.msk [vmem:[%s164 + $0x60] sm:$0xff] %vm536, %v532
        %550 = vst.msk [vmem:[%s164 + $0x68] sm:$0xff] %vm536, %v533
        %551 = vst.msk [vmem:[%s164 + $0x70] sm:$0xff] %vm536, %v534
        %552 = vst.msk [vmem:[%s164 + $0x78] sm:$0xff] %vm536, %v535
        %s553 = smul.u32 16, %s16
        %p554 = scmp.lt.s32.totalorder %s553, 63
        %s555 = scalar_select %p554, %s553, 63
        %s556 = smul.addr %s555, 8
        %s557 = scalar_lea.vmem %s2, %s556
        // Predicated region
        $region33: #{tpu_custom_call.1} parent=27 // pred_check
          %p558 = pneg %p81
        $region34: #{tpu_custom_call.1} parent=27 // pred_check_branch
          %560 = sbr.rel (%p558) target = $region36
        $region35: #{tpu_custom_call.1} parent=27 // pred_region
          %s561 = smul.u32 16, %s16
        $region36: #{tpu_custom_call.1} parent=27 // pred_fallthru
          _
      $region28: #{tpu_custom_call.1} parent=5 // pred_fallthru
        _
      %p562 = scmp.le.s32.totalorder 2, %s11
      // Predicated region
      $region37: #{tpu_custom_call.1} parent=5 // pred_check
        %p563 = pneg %p562
      $region38: #{tpu_custom_call.1} parent=5 // pred_check_branch
        %565 = sbr.rel (%p563) target = $region40
      $region39: #{tpu_custom_call.1} parent=5 // pred_region
        %s566 = ssub.s32 %s11, 2
        // Predicated region
        $region41: #{tpu_custom_call.1} parent=39 // pred_check
          %p567 = pneg %p87
        $region42: #{tpu_custom_call.1} parent=39 // pred_check_branch
          %569 = sbr.rel (%p567) target = $region44
        $region43: #{tpu_custom_call.1} parent=39 // pred_region
          %s570 = smul.u32 16, %s17
          %p571 = scmp.lt.s32.totalorder %s570, 63
          %s572 = scalar_select %p571, %s570, 63
          %s573 = smul.addr %s572, 8
          %s574 = scalar_lea.vmem %s2, %s573
        $region44: #{tpu_custom_call.1} parent=39 // pred_fallthru
          _
      $region40: #{tpu_custom_call.1} parent=5 // pred_fallthru
        _
    $region6: #{tpu_custom_call.1} parent=1 // loop_footer
      %s15 = sadd.s32 1, %s11
    $region7: #{tpu_custom_call.1} parent=1 // loop_footer_branch
      %10 = sbr.rel target = $region3
    $region8: #{tpu_custom_call.1} parent=1 // loop_exit
      _
    %575 = vsyncpa [#allocation3], 1
    %s576 = scalar_lea.sflag [#allocation3], 1
    %577 = vsyncpa %s576, 1

</llo_original>
